<compile_context>
chip_gen: v7x
topology: tpu7x:2x2x1
jax: 0.10.0
libtpu: 0.0.40
codegen_flags: <defaults>
</compile_context>

<pallas_src>
import jax
import jax.numpy as jnp
from jax.experimental import pallas as pl
from jax.experimental.pallas import tpu as pltpu


HEAD_PAD = 128    # fused head output lanes: cols [0, A) = Q-values, rest exactly 0


def _dueling_dqn_kernel(x_ref, w1_ref, b1_ref, w2_ref, b2_ref,
                        wbr_ref, bbr_ref, wh_ref, bh_ref, out_ref):
    f32 = jnp.float32
    bf16 = jnp.bfloat16

    x = x_ref[...].astype(bf16)                                     # (TB, state_dim)

    # f1 + relu  (bf16 relu: cast the f32 accumulator first)
    h1 = jnp.dot(x, w1_ref[...], preferred_element_type=f32) + b1_ref[...]
    h1 = jnp.maximum(h1.astype(bf16), 0.0)                          # (TB, 512)

    # f2 + relu
    h2 = jnp.dot(h1, w2_ref[...], preferred_element_type=f32) + b2_ref[...]
    h2 = jnp.maximum(h2.astype(bf16), 0.0)                          # (TB, 256)

    # fused value/advantage hidden branches (+ relu):
    #   cols 0:128 = val_hidden, cols 128:256 = adv_hidden
    hb = jnp.dot(h2, wbr_ref[...], preferred_element_type=f32) + bbr_ref[...]
    hb = jnp.maximum(hb.astype(bf16), 0.0)                          # (TB, 256)

    # fused heads with the dueling combine folded into the weights:
    #   cols [0, A) already hold adv + val - mean(adv); cols >= A are zero.
    head = jnp.dot(hb, wh_ref[...], preferred_element_type=f32) + bh_ref[...]
    out_ref[...] = head.astype(out_ref.dtype)                       # (TB, 128)


def pack_params(params, state_dim, action_dim):
    """Fuse / fold / bf16-cast the raw (in, out)-layout f32 parameters."""
    (w1, b1, w2, b2, wvh, bvh, wah, bah, wv, bv, wa, ba) = params
    assert action_dim + 1 <= HEAD_PAD, "action_dim too large for 128-lane head slab"
    bf16 = jnp.bfloat16
    A = action_dim

    # fuse the two 256->128 hidden branches into one 256->256 matmul
    wbr = jnp.concatenate([wvh, wah], axis=1)          # (256, 256)
    bbr = jnp.concatenate([bvh, bah], axis=1)          # (1, 256)

    # fuse the two heads into one block-diagonal 256 -> 128 matmul:
    #   rows 0:128  (val_hidden)  -> col A         (val)
    #   rows 128:256 (adv_hidden) -> cols [0, A)   (adv)
    wh = jnp.zeros((256, HEAD_PAD), jnp.float32)
    wh = wh.at[128:256, :A].set(wa)
    wh = wh.at[0:128, A].set(wv[:, 0])
    bh = jnp.zeros((1, HEAD_PAD), jnp.float32)
    bh = bh.at[0, :A].set(ba[0])
    bh = bh.at[0, A].set(bv[0, 0])

    # fold the dueling combine Q = adv + val - mean(adv) into the head:
    #   M[j, j'] = delta(j, j') - 1/A  (j, j' < A)
    #   M[A, j'] = 1                   (j' < A)
    #   all other entries 0  -> output cols >= A become exactly zero.
    m = jnp.zeros((HEAD_PAD, HEAD_PAD), jnp.float32)
    m = m.at[:A, :A].set(jnp.eye(A, dtype=jnp.float32) - 1.0 / A)
    m = m.at[A, :A].set(1.0)
    wh = wh @ m            # fold in f32, cast to bf16 afterwards
    bh = bh @ m            # stays f32

    return (w1.astype(bf16), b1,
            w2.astype(bf16), b2,
            wbr.astype(bf16), bbr,
            wh.astype(bf16), bh)


def dueling_dqn_forward(x, packed_params, action_dim, *,
                        batch_tile=512, min_grid_steps=1):
    """min_grid_steps=2 is recommended on v7x (2 TensorCores) for large batches."""
    w1, b1, w2, b2, wbr, bbr, wh, bh = packed_params
    B, state_dim = x.shape

    tb = min(batch_tile, pl.cdiv(B, min_grid_steps))
    tb = max(8, ((tb + 7) // 8) * 8)          # sublane-aligned batch tile
    b_pad = pl.cdiv(B, tb) * tb

    # rows-only pad (no 128-lane inflation of the input stream); skip if exact fit
    if b_pad != B:
        x_in = jnp.zeros((b_pad, state_dim), x.dtype).at[:B].set(x)
    else:
        x_in = x

    def const_spec(shape):
        # full-array block, same block every grid step -> parameters stay resident
        return pl.BlockSpec(shape, lambda i: (0, 0))

    param_bytes = sum(int(p.size) * p.dtype.itemsize
                      for p in (w1, b1, w2, b2, wbr, bbr, wh, bh))
    io_bytes = int(x_in.size) * x_in.dtype.itemsize + b_pad * HEAD_PAD * 2
    flops = 2 * b_pad * (state_dim * 512 + 512 * 256 + 256 * 256 + 256 * HEAD_PAD)

    out_pad = pl.pallas_call(
        _dueling_dqn_kernel,
        out_shape=jax.ShapeDtypeStruct((b_pad, HEAD_PAD), jnp.bfloat16),
        grid=(b_pad // tb,),
        in_specs=[
            pl.BlockSpec((tb, state_dim), lambda i: (i, 0)),   # x batch tile
            const_spec(w1.shape), const_spec(b1.shape),
            const_spec(w2.shape), const_spec(b2.shape),
            const_spec(wbr.shape), const_spec(bbr.shape),
            const_spec(wh.shape), const_spec(bh.shape),
        ],
        out_specs=pl.BlockSpec((tb, HEAD_PAD), lambda i: (i, 0)),
        compiler_params=pltpu.CompilerParams(
            dimension_semantics=("parallel",)),
        cost_estimate=pl.CostEstimate(
            flops=flops, transcendentals=0,
            bytes_accessed=param_bytes + io_bytes),
    )(x_in, w1, b1, w2, b2, wbr, bbr, wh, bh)

    return out_pad[:B, :action_dim].astype(jnp.float32)


def init_linear(key, fan_in, fan_out):
    # torch nn.Linear default init: U(-1/sqrt(fan_in), 1/sqrt(fan_in))
    kw, kb = jax.random.split(key)
    bound = 1.0 / jnp.sqrt(jnp.float32(fan_in))
    w = jax.random.uniform(kw, (fan_in, fan_out), jnp.float32, -bound, bound)
    b = jax.random.uniform(kb, (1, fan_out), jnp.float32, -bound, bound)
    return w, b


def make_params(key, state_dim, action_dim):
    keys = jax.random.split(key, 6)
    w1, b1 = init_linear(keys[0], state_dim, 512)
    w2, b2 = init_linear(keys[1], 512, 256)
    wvh, bvh = init_linear(keys[2], 256, 128)
    wah, bah = init_linear(keys[3], 256, 128)
    wv, bv = init_linear(keys[4], 128, 1)
    wa, ba = init_linear(keys[5], 128, action_dim)
    return (w1, b1, w2, b2, wvh, bvh, wah, bah, wv, bv, wa, ba)


def reference_forward(x, params):
    # pure f32 reference, identical to the PyTorch module's forward
    (w1, b1, w2, b2, wvh, bvh, wah, bah, wv, bv, wa, ba) = params
    h1 = jnp.maximum(x @ w1 + b1, 0.0)
    h2 = jnp.maximum(h1 @ w2 + b2, 0.0)
    vh = jnp.maximum(h2 @ wvh + bvh, 0.0)
    ah = jnp.maximum(h2 @ wah + bah, 0.0)
    val = vh @ wv + bv
    adv = ah @ wa + ba
    return adv + val - jnp.mean(adv, axis=1, keepdims=True)


if __name__ == "__main__":
    state_dim = 16
    action_dim = 4
    batch = 2

    key = jax.random.PRNGKey(0)
    kx, kp = jax.random.split(key)
    x = jax.random.normal(kx, (batch, state_dim), jnp.float32)
    params = make_params(kp, state_dim, action_dim)
    packed = pack_params(params, state_dim, action_dim)

    out = dueling_dqn_forward(x, packed, action_dim)
    out = jax.block_until_ready(out)

    ref = reference_forward(x, params)
    assert out.shape == (batch, action_dim)
    max_err = float(jnp.max(jnp.abs(out - ref)))
    # bf16 weights/activations/output inside the kernel -> looser tolerance vs f32
    assert jnp.allclose(out, ref, atol=2e-2, rtol=2e-2), \
        f"mismatch vs reference (max abs err {max_err})"

    print("KERNEL_OK")
</pallas_src>

<mosaic_0001>
module attributes {stable_mosaic.version = 11 : i64} {
  func.func @_dueling_dqn_kernel(%arg0: i32, %arg1: memref<8x16xf32, #tpu.memory_space<vmem>>, %arg2: memref<16x512xbf16, #tpu.memory_space<vmem>>, %arg3: memref<1x512xf32, #tpu.memory_space<vmem>>, %arg4: memref<512x256xbf16, #tpu.memory_space<vmem>>, %arg5: memref<1x256xf32, #tpu.memory_space<vmem>>, %arg6: memref<256x256xbf16, #tpu.memory_space<vmem>>, %arg7: memref<1x256xf32, #tpu.memory_space<vmem>>, %arg8: memref<256x128xbf16, #tpu.memory_space<vmem>>, %arg9: memref<1x128xf32, #tpu.memory_space<vmem>>, %arg10: memref<8x128xbf16, #tpu.memory_space<vmem>>) attributes {dimension_semantics = [#tpu.dimension_semantics<parallel>], iteration_bounds = array<i64: 1>, scalar_prefetch = 0 : i64, scratch_operands = 0 : i64, tpu.core_type = #tpu.core_type<tc>, window_params = [{transform_indices = @transform_0, window_bounds = array<i64: 8, 16>}, {pipeline_mode = #tpu.pipeline_mode<synchronous>, transform_indices = @transform_1, window_bounds = array<i64: 16, 512>}, {pipeline_mode = #tpu.pipeline_mode<synchronous>, transform_indices = @transform_2, window_bounds = array<i64: 1, 512>}, {pipeline_mode = #tpu.pipeline_mode<synchronous>, transform_indices = @transform_3, window_bounds = array<i64: 512, 256>}, {pipeline_mode = #tpu.pipeline_mode<synchronous>, transform_indices = @transform_4, window_bounds = array<i64: 1, 256>}, {pipeline_mode = #tpu.pipeline_mode<synchronous>, transform_indices = @transform_5, window_bounds = array<i64: 256, 256>}, {pipeline_mode = #tpu.pipeline_mode<synchronous>, transform_indices = @transform_6, window_bounds = array<i64: 1, 256>}, {pipeline_mode = #tpu.pipeline_mode<synchronous>, transform_indices = @transform_7, window_bounds = array<i64: 256, 128>}, {pipeline_mode = #tpu.pipeline_mode<synchronous>, transform_indices = @transform_8, window_bounds = array<i64: 1, 128>}, {transform_indices = @transform_9, window_bounds = array<i64: 8, 128>}]} {
    %c0 = arith.constant 0 : index
    %c0_0 = arith.constant 0 : index
    %0 = vector.load %arg1[%c0, %c0_0] : memref<8x16xf32, #tpu.memory_space<vmem>>, vector<8x16xf32>
    %1 = arith.truncf %0 : vector<8x16xf32> to vector<8x16xbf16>
    %c0_1 = arith.constant 0 : index
    %c0_2 = arith.constant 0 : index
    %2 = vector.load %arg2[%c0_1, %c0_2] : memref<16x512xbf16, #tpu.memory_space<vmem>>, vector<16x512xbf16>
    %cst = arith.constant dense<0.000000e+00> : vector<8x512xf32>
    %3 = tpu.matmul %1, %2, %cst {dimension_numbers = #tpu.dot_dimension_numbers<[1], [0], [0], [1], [0, 0, 1, 1], [], []>} : vector<8x16xbf16>, vector<16x512xbf16>, vector<8x512xf32> -> vector<8x512xf32>
    %c0_3 = arith.constant 0 : index
    %c0_4 = arith.constant 0 : index
    %4 = vector.load %arg3[%c0_3, %c0_4] : memref<1x512xf32, #tpu.memory_space<vmem>>, vector<1x512xf32>
    %5 = vector.broadcast %4 : vector<1x512xf32> to vector<8x512xf32>
    %6 = arith.addf %3, %5 : vector<8x512xf32>
    %7 = arith.truncf %6 : vector<8x512xf32> to vector<8x512xbf16>
    %cst_5 = arith.constant 0.000000e+00 : bf16
    %8 = vector.broadcast %cst_5 : bf16 to vector<8x512xbf16>
    %9 = arith.maximumf %7, %8 : vector<8x512xbf16>
    %c0_6 = arith.constant 0 : index
    %c0_7 = arith.constant 0 : index
    %10 = vector.load %arg4[%c0_6, %c0_7] : memref<512x256xbf16, #tpu.memory_space<vmem>>, vector<512x256xbf16>
    %cst_8 = arith.constant dense<0.000000e+00> : vector<8x256xf32>
    %11 = tpu.matmul %9, %10, %cst_8 {dimension_numbers = #tpu.dot_dimension_numbers<[1], [0], [0], [1], [0, 0, 1, 1], [], []>} : vector<8x512xbf16>, vector<512x256xbf16>, vector<8x256xf32> -> vector<8x256xf32>
    %c0_9 = arith.constant 0 : index
    %c0_10 = arith.constant 0 : index
    %12 = vector.load %arg5[%c0_9, %c0_10] : memref<1x256xf32, #tpu.memory_space<vmem>>, vector<1x256xf32>
    %13 = vector.broadcast %12 : vector<1x256xf32> to vector<8x256xf32>
    %14 = arith.addf %11, %13 : vector<8x256xf32>
    %15 = arith.truncf %14 : vector<8x256xf32> to vector<8x256xbf16>
    %cst_11 = arith.constant 0.000000e+00 : bf16
    %16 = vector.broadcast %cst_11 : bf16 to vector<8x256xbf16>
    %17 = arith.maximumf %15, %16 : vector<8x256xbf16>
    %c0_12 = arith.constant 0 : index
    %c0_13 = arith.constant 0 : index
    %18 = vector.load %arg6[%c0_12, %c0_13] : memref<256x256xbf16, #tpu.memory_space<vmem>>, vector<256x256xbf16>
    %cst_14 = arith.constant dense<0.000000e+00> : vector<8x256xf32>
    %19 = tpu.matmul %17, %18, %cst_14 {dimension_numbers = #tpu.dot_dimension_numbers<[1], [0], [0], [1], [0, 0, 1, 1], [], []>} : vector<8x256xbf16>, vector<256x256xbf16>, vector<8x256xf32> -> vector<8x256xf32>
    %c0_15 = arith.constant 0 : index
    %c0_16 = arith.constant 0 : index
    %20 = vector.load %arg7[%c0_15, %c0_16] : memref<1x256xf32, #tpu.memory_space<vmem>>, vector<1x256xf32>
    %21 = vector.broadcast %20 : vector<1x256xf32> to vector<8x256xf32>
    %22 = arith.addf %19, %21 : vector<8x256xf32>
    %23 = arith.truncf %22 : vector<8x256xf32> to vector<8x256xbf16>
    %cst_17 = arith.constant 0.000000e+00 : bf16
    %24 = vector.broadcast %cst_17 : bf16 to vector<8x256xbf16>
    %25 = arith.maximumf %23, %24 : vector<8x256xbf16>
    %c0_18 = arith.constant 0 : index
    %c0_19 = arith.constant 0 : index
    %26 = vector.load %arg8[%c0_18, %c0_19] : memref<256x128xbf16, #tpu.memory_space<vmem>>, vector<256x128xbf16>
    %cst_20 = arith.constant dense<0.000000e+00> : vector<8x128xf32>
    %27 = tpu.matmul %25, %26, %cst_20 {dimension_numbers = #tpu.dot_dimension_numbers<[1], [0], [0], [1], [0, 0, 1, 1], [], []>} : vector<8x256xbf16>, vector<256x128xbf16>, vector<8x128xf32> -> vector<8x128xf32>
    %c0_21 = arith.constant 0 : index
    %c0_22 = arith.constant 0 : index
    %28 = vector.load %arg9[%c0_21, %c0_22] : memref<1x128xf32, #tpu.memory_space<vmem>>, vector<1x128xf32>
    %29 = vector.broadcast %28 : vector<1x128xf32> to vector<8x128xf32>
    %30 = arith.addf %27, %29 : vector<8x128xf32>
    %31 = arith.truncf %30 : vector<8x128xf32> to vector<8x128xbf16>
    %c0_23 = arith.constant 0 : index
    %c0_24 = arith.constant 0 : index
    %32 = vector.load %arg10[%c0_23, %c0_24] : memref<8x128xbf16, #tpu.memory_space<vmem>>, vector<8x128xbf16>
    tpu.vector_store %arg10[%c0_23, %c0_24], %31 {strides = array<i32>} : memref<8x128xbf16, #tpu.memory_space<vmem>>, vector<8x128xbf16>,
    return
  }
  func.func @transform_0(%arg0: i32) -> (i32, i32) {
    %c0_i32 = arith.constant 0 : i32
    %c0_i32_0 = arith.constant 0 : i32
    return %arg0, %c0_i32 : i32, i32
  }
  func.func @transform_1(%arg0: i32) -> (i32, i32) {
    %c0_i32 = arith.constant 0 : i32
    %c0_i32_0 = arith.constant 0 : i32
    %c0_i32_1 = arith.constant 0 : i32
    return %c0_i32, %c0_i32_0 : i32, i32
  }
  func.func @transform_2(%arg0: i32) -> (i32, i32) {
    %c0_i32 = arith.constant 0 : i32
    %c0_i32_0 = arith.constant 0 : i32
    %c0_i32_1 = arith.constant 0 : i32
    return %c0_i32, %c0_i32_0 : i32, i32
  }
  func.func @transform_3(%arg0: i32) -> (i32, i32) {
    %c0_i32 = arith.constant 0 : i32
    %c0_i32_0 = arith.constant 0 : i32
    %c0_i32_1 = arith.constant 0 : i32
    return %c0_i32, %c0_i32_0 : i32, i32
  }
  func.func @transform_4(%arg0: i32) -> (i32, i32) {
    %c0_i32 = arith.constant 0 : i32
    %c0_i32_0 = arith.constant 0 : i32
    %c0_i32_1 = arith.constant 0 : i32
    return %c0_i32, %c0_i32_0 : i32, i32
  }
  func.func @transform_5(%arg0: i32) -> (i32, i32) {
    %c0_i32 = arith.constant 0 : i32
    %c0_i32_0 = arith.constant 0 : i32
    %c0_i32_1 = arith.constant 0 : i32
    return %c0_i32, %c0_i32_0 : i32, i32
  }
  func.func @transform_6(%arg0: i32) -> (i32, i32) {
    %c0_i32 = arith.constant 0 : i32
    %c0_i32_0 = arith.constant 0 : i32
    %c0_i32_1 = arith.constant 0 : i32
    return %c0_i32, %c0_i32_0 : i32, i32
  }
  func.func @transform_7(%arg0: i32) -> (i32, i32) {
    %c0_i32 = arith.constant 0 : i32
    %c0_i32_0 = arith.constant 0 : i32
    %c0_i32_1 = arith.constant 0 : i32
    return %c0_i32, %c0_i32_0 : i32, i32
  }
  func.func @transform_8(%arg0: i32) -> (i32, i32) {
    %c0_i32 = arith.constant 0 : i32
    %c0_i32_0 = arith.constant 0 : i32
    %c0_i32_1 = arith.constant 0 : i32
    return %c0_i32, %c0_i32_0 : i32, i32
  }
  func.func @transform_9(%arg0: i32) -> (i32, i32) {
    %c0_i32 = arith.constant 0 : i32
    %c0_i32_0 = arith.constant 0 : i32
    return %arg0, %c0_i32 : i32, i32
  }
}

</mosaic_0001>

<llo_original>
// kernel: tpu_custom_call.1
$region0: #{tpu_custom_call.1}
  #allocation0 [shape = 'u32[]', space=smem, size = 0x4, offset = 0x4, fixed_abs, tag = 'smem constant byte address 0x4 - core index']
  #allocation1 [shape = 'u32[144,128]{1,0:T(1,128)}', space=vmem, size = 0x12000, scoped, tag = 'internal scratch']
  %s0 = inlined_call_operand.hbm [shape: f32[8,16], index: 0, kind: input, shape index: {}]
  %s1 = inlined_call_operand.hbm [shape: bf16[16,512], index: 1, kind: input, shape index: {}]
  %s2 = inlined_call_operand.vmem [shape: f32[1,512], index: 2, kind: input, shape index: {}]
  %s3 = inlined_call_operand.hbm [shape: bf16[512,256], index: 3, kind: input, shape index: {}]
  %s4 = inlined_call_operand.vmem [shape: f32[1,256], index: 4, kind: input, shape index: {}]
  %s5 = inlined_call_operand.hbm [shape: bf16[256,256], index: 5, kind: input, shape index: {}]
  %s6 = inlined_call_operand.vmem [shape: f32[1,256], index: 6, kind: input, shape index: {}]
  %s7 = inlined_call_operand.hbm [shape: bf16[256,128], index: 7, kind: input, shape index: {}]
  %s8 = inlined_call_operand.vmem [shape: f32[1,128], index: 8, kind: input, shape index: {}]
  %s9 = inlined_call_operand.hbm [shape: bf16[8,128], index: 9, kind: output, shape index: {}]
  %s10 = sld [smem:[#allocation0]]
  $region66: #{tpu_custom_call.1} parent=0
    _
  %s12 = ssub.s32 1, %s10
  %s13 = scalar_select 0, %s12, %s10
  $region1: #{tpu_custom_call.1} parent=0
    #allocation2 [shape = 'u8[4096]{0}', space=vmem, size = 0x1000, scoped, tag = 'input window, operand 0, single buffered']
    #allocation3 [shape = 's32[1]{0}', space=sflag, size = 0x4, scoped, tag = 'scoped memory for tpu_custom_call.1']
    #allocation4 [shape = 's32[1]{0}', space=sflag, size = 0x4, scoped, tag = 'scoped memory for tpu_custom_call.1']
    #allocation5 [shape = 'u8[16384]{0}', space=vmem, size = 0x4000, scoped, tag = 'input window, operand 1, single buffered']
    #allocation6 [shape = 's32[1]{0}', space=sflag, size = 0x4, scoped, tag = 'scoped memory for tpu_custom_call.1']
    #allocation7 [shape = 'u8[262144]{0}', space=vmem, size = 0x40000, scoped, tag = 'input window, operand 3, single buffered']
    #allocation8 [shape = 'u8[131072]{0}', space=vmem, size = 0x20000, scoped, tag = 'input window, operand 5, single buffered']
    #allocation9 [shape = 's32[1]{0}', space=sflag, size = 0x4, scoped, tag = 'scoped memory for tpu_custom_call.1']
    #allocation10 [shape = 'u8[65536]{0}', space=vmem, size = 0x10000, scoped, tag = 'input window, operand 7, single buffered']
    #allocation11 [shape = 'u8[2048]{0}', space=vmem, size = 0x800, scoped, tag = 'output window, operand 0, single buffered']
    %14 = vsyncpa [#allocation3], 0
    %15 = vsyncpa [#allocation6], 0
    %16 = vsyncpa [#allocation9], 0
    %17 = vsyncpa [#allocation4], 0
    // Predicated region
    $region2: #{tpu_custom_call.1} parent=1 // pred_check
      _
    $region3: #{tpu_custom_call.1} parent=1 // pred_check_branch
      %19 = sbr.rel (0) target = $region5
    $region4: #{tpu_custom_call.1} parent=1 // pred_region
      %s21 = ssub.s32 128, 128
      %22 = vsyncadd [#allocation3], %s21
      %s24 = sshll.u32 [#allocation2], 4
      %s25 = int_to_ptr.vmem [resolvable:$true] %s24
      %27 = dma.hbm_to_vmem [thread:$0]  %s0, 128, %s25, [#allocation3]
    $region5: #{tpu_custom_call.1} parent=1 // pred_fallthru
      _
    // Predicated region
    $region6: #{tpu_custom_call.1} parent=1 // pred_check
      _
    $region7: #{tpu_custom_call.1} parent=1 // pred_check_branch
      %29 = sbr.rel (0) target = $region9
    $region8: #{tpu_custom_call.1} parent=1 // pred_region
      %s31 = ssub.s32 512, 512
      %32 = vsyncadd [#allocation6], %s31
      %s33 = sshll.u32 [#allocation5], 4
      %s34 = int_to_ptr.vmem [resolvable:$true] %s33
      %39 = dma.hbm_to_vmem [thread:$0]  %s1, 512, %s34, [#allocation6], 256, 256, 16
    $region9: #{tpu_custom_call.1} parent=1 // pred_fallthru
      _
    // Predicated region
    $region10: #{tpu_custom_call.1} parent=1 // pred_check
      _
    $region11: #{tpu_custom_call.1} parent=1 // pred_check_branch
      %41 = sbr.rel (0) target = $region13
    $region12: #{tpu_custom_call.1} parent=1 // pred_region
      _
    $region13: #{tpu_custom_call.1} parent=1 // pred_fallthru
      _
    // Predicated region
    $region14: #{tpu_custom_call.1} parent=1 // pred_check
      _
    $region15: #{tpu_custom_call.1} parent=1 // pred_check_branch
      %43 = sbr.rel (0) target = $region17
    $region16: #{tpu_custom_call.1} parent=1 // pred_region
      %s45 = ssub.s32 8192, 8192
      %46 = vsyncadd [#allocation6], %s45
      %s47 = sshll.u32 [#allocation7], 4
      %s48 = int_to_ptr.vmem [resolvable:$true] %s47
      %53 = dma.hbm_to_vmem [thread:$0]  %s3, 8192, %s48, [#allocation6], 128, 128, 8
    $region17: #{tpu_custom_call.1} parent=1 // pred_fallthru
      _
    // Predicated region
    $region18: #{tpu_custom_call.1} parent=1 // pred_check
      _
    $region19: #{tpu_custom_call.1} parent=1 // pred_check_branch
      %55 = sbr.rel (0) target = $region21
    $region20: #{tpu_custom_call.1} parent=1 // pred_region
      _
    $region21: #{tpu_custom_call.1} parent=1 // pred_fallthru
      _
    // Predicated region
    $region22: #{tpu_custom_call.1} parent=1 // pred_check
      _
    $region23: #{tpu_custom_call.1} parent=1 // pred_check_branch
      %57 = sbr.rel (0) target = $region25
    $region24: #{tpu_custom_call.1} parent=1 // pred_region
      %s59 = ssub.s32 4096, 4096
      %60 = vsyncadd [#allocation9], %s59
      %s61 = sshll.u32 [#allocation8], 4
      %s62 = int_to_ptr.vmem [resolvable:$true] %s61
      %67 = dma.hbm_to_vmem [thread:$0]  %s5, 4096, %s62, [#allocation9], 128, 128, 8
    $region25: #{tpu_custom_call.1} parent=1 // pred_fallthru
      _
    // Predicated region
    $region26: #{tpu_custom_call.1} parent=1 // pred_check
      _
    $region27: #{tpu_custom_call.1} parent=1 // pred_check_branch
      %69 = sbr.rel (0) target = $region29
    $region28: #{tpu_custom_call.1} parent=1 // pred_region
      _
    $region29: #{tpu_custom_call.1} parent=1 // pred_fallthru
      _
    // Predicated region
    $region30: #{tpu_custom_call.1} parent=1 // pred_check
      _
    $region31: #{tpu_custom_call.1} parent=1 // pred_check_branch
      %71 = sbr.rel (0) target = $region33
    $region32: #{tpu_custom_call.1} parent=1 // pred_region
      %s73 = ssub.s32 2048, 2048
      %74 = vsyncadd [#allocation9], %s73
      %s75 = sshll.u32 [#allocation10], 4
      %s76 = int_to_ptr.vmem [resolvable:$true] %s75
      %81 = dma.hbm_to_vmem [thread:$0]  %s7, 2048, %s76, [#allocation9], 64, 64, 4
    $region33: #{tpu_custom_call.1} parent=1 // pred_fallthru
      _
    // Predicated region
    $region34: #{tpu_custom_call.1} parent=1 // pred_check
      _
    $region35: #{tpu_custom_call.1} parent=1 // pred_check_branch
      %83 = sbr.rel (0) target = $region37
    $region36: #{tpu_custom_call.1} parent=1 // pred_region
      _
    $region37: #{tpu_custom_call.1} parent=1 // pred_fallthru
      _
    // Predicated region
    $region38: #{tpu_custom_call.1} parent=1 // pred_check
      _
    $region39: #{tpu_custom_call.1} parent=1 // pred_check_branch
      %85 = sbr.rel (0) target = $region41
    $region40: #{tpu_custom_call.1} parent=1 // pred_region
      %86 = dma.done [#allocation3], 128
    $region41: #{tpu_custom_call.1} parent=1 // pred_fallthru
      _
    // Predicated region
    $region42: #{tpu_custom_call.1} parent=1 // pred_check
      _
    $region43: #{tpu_custom_call.1} parent=1 // pred_check_branch
      %88 = sbr.rel (0) target = $region45
    $region44: #{tpu_custom_call.1} parent=1 // pred_region
      %89 = dma.done [#allocation6], 512
    $region45: #{tpu_custom_call.1} parent=1 // pred_fallthru
      _
    // Predicated region
    $region46: #{tpu_custom_call.1} parent=1 // pred_check
      _
    $region47: #{tpu_custom_call.1} parent=1 // pred_check_branch
      %91 = sbr.rel (0) target = $region49
    $region48: #{tpu_custom_call.1} parent=1 // pred_region
      %92 = dma.done [#allocation6], 8192
    $region49: #{tpu_custom_call.1} parent=1 // pred_fallthru
      _
    // Predicated region
    $region50: #{tpu_custom_call.1} parent=1 // pred_check
      _
    $region51: #{tpu_custom_call.1} parent=1 // pred_check_branch
      %94 = sbr.rel (0) target = $region53
    $region52: #{tpu_custom_call.1} parent=1 // pred_region
      %95 = dma.done [#allocation9], 4096
    $region53: #{tpu_custom_call.1} parent=1 // pred_fallthru
      _
    // Predicated region
    $region54: #{tpu_custom_call.1} parent=1 // pred_check
      _
    $region55: #{tpu_custom_call.1} parent=1 // pred_check_branch
      %97 = sbr.rel (0) target = $region57
    $region56: #{tpu_custom_call.1} parent=1 // pred_region
      %98 = dma.done [#allocation9], 2048
    $region57: #{tpu_custom_call.1} parent=1 // pred_fallthru
      _
    %v100 = vld [vmem:[#allocation2] sm:$0xff]
    %v101 = vpack.c.bf16 %v100, %v100
    %v102 = vld [vmem:[#allocation5] sm:$0xff]
    %v103 = vld [vmem:[#allocation5 + $0x8] sm:$0xff]
    %v104 = vld [vmem:[#allocation5 + $0x10] sm:$0xff]
    %v105 = vld [vmem:[#allocation5 + $0x18] sm:$0xff]
    %v106 = vld [vmem:[%s2] sm:$0xf]
    %v108 = vlaneseq
    %v109 = vshrl.u32 %v108, 7
    %v110 = vsub.s32 0, %v109
    %v111 = vrot.slane %v106, %v110
    %v112 = vlaneseq
    %v113 = vshrl.u32 %v112, 7
    %v114 = vsub.s32 1, %v113
    %v115 = vrot.slane %v106, %v114
    %v116 = vlaneseq
    %v117 = vshrl.u32 %v116, 7
    %v118 = vsub.s32 2, %v117
    %v119 = vrot.slane %v106, %v118
    %v120 = vlaneseq
    %v121 = vshrl.u32 %v120, 7
    %v122 = vsub.s32 3, %v121
    %v123 = vrot.slane %v106, %v122
    %v132 = vunpack.c.l.b16 %v102
    %v133 = vunpack.c.h.b16 %v102
    %v134 = vunpack.c.l.b16 %v103
    %v135 = vunpack.c.h.b16 %v103
    %v136 = vunpack.c.l.b16 %v104
    %v137 = vunpack.c.h.b16 %v104
    %v138 = vunpack.c.l.b16 %v105
    %v139 = vunpack.c.h.b16 %v105
    %v140 = vpack.c.b16 %v136, %v132
    %v141 = vpack.c.b16 %v137, %v133
    %v142 = vpack.c.b16 %v138, %v134
    %v143 = vpack.c.b16 %v139, %v135
    %vm148 = vcmask 130048
    %v150 = vsel %vm148, %v101, 0
    %152 = vmatprep.subr.bf16.mxu0 %v141
    %153 = vmatpush1.bf16.msra.mxu0 %v140
    %154 = vmatprep.subr.bf16.mxu0 0
    %155 = vmatpush1.bf16.msra.mxu0 0
    %156 = vmatprep.subr.bf16.mxu0 0
    %157 = vmatpush1.bf16.msra.mxu0 0
    %158 = vmatprep.subr.bf16.mxu0 0
    %159 = vmatpush1.bf16.msra.mxu0 0
    %160 = vmatprep.subr.bf16.mxu0 0
    %161 = vmatpush1.bf16.msra.mxu0 0
    %162 = vmatprep.subr.bf16.mxu0 0
    %163 = vmatpush1.bf16.msra.mxu0 0
    %164 = vmatprep.subr.bf16.mxu0 0
    %165 = vmatpush1.bf16.msra.mxu0 0
    %166 = vmatprep.subr.bf16.mxu0 0
    %167 = vmatpush1.bf16.msra.mxu0 0
    %168 = vmatprep.subr.bf16.mxu0 0
    %169 = vmatpush1.bf16.msra.mxu0 0
    %170 = vmatprep.subr.bf16.mxu0 0
    %171 = vmatpush1.bf16.msra.mxu0 0
    %172 = vmatprep.subr.bf16.mxu0 0
    %173 = vmatpush1.bf16.msra.mxu0 0
    %174 = vmatprep.subr.bf16.mxu0 0
    %175 = vmatpush1.bf16.msra.mxu0 0
    %176 = vmatprep.subr.bf16.mxu0 0
    %177 = vmatpush1.bf16.msra.mxu0 0
    %178 = vmatprep.subr.bf16.mxu0 0
    %179 = vmatpush1.bf16.msra.mxu0 0
    %180 = vmatprep.subr.bf16.mxu0 0
    %181 = vmatpush1.bf16.msra.mxu0 0
    %182 = vmatprep.subr.bf16.mxu0 0
    %183 = vmatpush1.bf16.msra.mxu0 0
    %184 = vmatprep.mubr.bf16.mxu0 0
    %185 = vmatmul.mubr.bf16.gmra.mrb[0].mxu0 %v150
    %v186 = vpop.f32.mrb[0].mxu0
    %v187 = vadd.f32 %v111, %v186
    %v188 = vpop.f32.mrb[0].mxu0
    %v189 = vadd.f32 %v115, %v188
    %v190 = vpop.f32.mrb[0].mxu0
    %v191 = vpop.f32.mrb[0].mxu0
    %192 = vdwg.mxu0
    %193 = vmatprep.subr.bf16.mxu0 %v143
    %194 = vmatpush1.bf16.msra.mxu0 %v142
    %195 = vmatprep.subr.bf16.mxu0 0
    %196 = vmatpush1.bf16.msra.mxu0 0
    %197 = vmatprep.subr.bf16.mxu0 0
    %198 = vmatpush1.bf16.msra.mxu0 0
    %199 = vmatprep.subr.bf16.mxu0 0
    %200 = vmatpush1.bf16.msra.mxu0 0
    %201 = vmatprep.subr.bf16.mxu0 0
    %202 = vmatpush1.bf16.msra.mxu0 0
    %203 = vmatprep.subr.bf16.mxu0 0
    %204 = vmatpush1.bf16.msra.mxu0 0
    %205 = vmatprep.subr.bf16.mxu0 0
    %206 = vmatpush1.bf16.msra.mxu0 0
    %207 = vmatprep.subr.bf16.mxu0 0
    %208 = vmatpush1.bf16.msra.mxu0 0
    %209 = vmatprep.subr.bf16.mxu0 0
    %210 = vmatpush1.bf16.msra.mxu0 0
    %211 = vmatprep.subr.bf16.mxu0 0
    %212 = vmatpush1.bf16.msra.mxu0 0
    %213 = vmatprep.subr.bf16.mxu0 0
    %214 = vmatpush1.bf16.msra.mxu0 0
    %215 = vmatprep.subr.bf16.mxu0 0
    %216 = vmatpush1.bf16.msra.mxu0 0
    %217 = vmatprep.subr.bf16.mxu0 0
    %218 = vmatpush1.bf16.msra.mxu0 0
    %219 = vmatprep.subr.bf16.mxu0 0
    %220 = vmatpush1.bf16.msra.mxu0 0
    %221 = vmatprep.subr.bf16.mxu0 0
    %222 = vmatpush1.bf16.msra.mxu0 0
    %223 = vmatprep.subr.bf16.mxu0 0
    %224 = vmatpush1.bf16.msra.mxu0 0
    %225 = vmatprep.mubr.bf16.mxu0 0
    %226 = vmatmul.mubr.bf16.gmra.mrb[0].mxu0 %v150
    %v227 = vpop.f32.mrb[0].mxu0
    %v228 = vadd.f32 %v119, %v227
    %v229 = vpop.f32.mrb[0].mxu0
    %v230 = vadd.f32 %v123, %v229
    %v231 = vpop.f32.mrb[0].mxu0
    %v232 = vpop.f32.mrb[0].mxu0
    %233 = vdwg.mxu0
    %v234 = vpack.c.bf16 %v187, %v187
    %v235 = vpack.c.bf16 %v189, %v189
    %v236 = vpack.c.bf16 %v228, %v228
    %v237 = vpack.c.bf16 %v230, %v230
    %v238 = vmax.bf16 %v234, 0
    %v239 = vmax.bf16 %v235, 0
    %v240 = vmax.bf16 %v236, 0
    %v241 = vmax.bf16 %v237, 0
    %v242 = vld [vmem:[#allocation7] sm:$0xff]
    %v243 = vld [vmem:[#allocation7 + $0x8] sm:$0xff]
    %v244 = vld [vmem:[#allocation7 + $0x10] sm:$0xff]
    %v245 = vld [vmem:[#allocation7 + $0x18] sm:$0xff]
    %v246 = vld [vmem:[#allocation7 + $0x20] sm:$0xff]
    %v247 = vld [vmem:[#allocation7 + $0x28] sm:$0xff]
    %v248 = vld [vmem:[#allocation7 + $0x30] sm:$0xff]
    %v249 = vld [vmem:[#allocation7 + $0x38] sm:$0xff]
    %v250 = vld [vmem:[#allocation7 + $0x40] sm:$0xff]
    %v251 = vld [vmem:[#allocation7 + $0x48] sm:$0xff]
    %v252 = vld [vmem:[#allocation7 + $0x50] sm:$0xff]
    %v253 = vld [vmem:[#allocation7 + $0x58] sm:$0xff]
    %v254 = vld [vmem:[#allocation7 + $0x60] sm:$0xff]
    %v255 = vld [vmem:[#allocation7 + $0x68] sm:$0xff]
    %v256 = vld [vmem:[#allocation7 + $0x70] sm:$0xff]
    %v257 = vld [vmem:[#allocation7 + $0x78] sm:$0xff]
    %v258 = vld [vmem:[#allocation7 + $0x80] sm:$0xff]
    %v259 = vld [vmem:[#allocation7 + $0x88] sm:$0xff]
    %v260 = vld [vmem:[#allocation7 + $0x90] sm:$0xff]
    %v261 = vld [vmem:[#allocation7 + $0x98] sm:$0xff]
    %v262 = vld [vmem:[#allocation7 + $0xa0] sm:$0xff]
    %v263 = vld [vmem:[#allocation7 + $0xa8] sm:$0xff]
    %v264 = vld [vmem:[#allocation7 + $0xb0] sm:$0xff]
    %v265 = vld [vmem:[#allocation7 + $0xb8] sm:$0xff]
    %v266 = vld [vmem:[#allocation7 + $0xc0] sm:$0xff]
    %v267 = vld [vmem:[#allocation7 + $0xc8] sm:$0xff]
    %v268 = vld [vmem:[#allocation7 + $0xd0] sm:$0xff]
    %v269 = vld [vmem:[#allocation7 + $0xd8] sm:$0xff]
    %v270 = vld [vmem:[#allocation7 + $0xe0] sm:$0xff]
    %v271 = vld [vmem:[#allocation7 + $0xe8] sm:$0xff]
    %v272 = vld [vmem:[#allocation7 + $0xf0] sm:$0xff]
    %v273 = vld [vmem:[#allocation7 + $0xf8] sm:$0xff]
    %v274 = vld [vmem:[#allocation7 + $0x100] sm:$0xff]
    %v275 = vld [vmem:[#allocation7 + $0x108] sm:$0xff]
    %v276 = vld [vmem:[#allocation7 + $0x110] sm:$0xff]
    %v277 = vld [vmem:[#allocation7 + $0x118] sm:$0xff]
    %v278 = vld [vmem:[#allocation7 + $0x120] sm:$0xff]
    %v279 = vld [vmem:[#allocation7 + $0x128] sm:$0xff]
    %v280 = vld [vmem:[#allocation7 + $0x130] sm:$0xff]
    %v281 = vld [vmem:[#allocation7 + $0x138] sm:$0xff]
    %v282 = vld [vmem:[#allocation7 + $0x140] sm:$0xff]
    %v283 = vld [vmem:[#allocation7 + $0x148] sm:$0xff]
    %v284 = vld [vmem:[#allocation7 + $0x150] sm:$0xff]
    %v285 = vld [vmem:[#allocation7 + $0x158] sm:$0xff]
    %v286 = vld [vmem:[#allocation7 + $0x160] sm:$0xff]
    %v287 = vld [vmem:[#allocation7 + $0x168] sm:$0xff]
    %v288 = vld [vmem:[#allocation7 + $0x170] sm:$0xff]
    %v289 = vld [vmem:[#allocation7 + $0x178] sm:$0xff]
    %v290 = vld [vmem:[#allocation7 + $0x180] sm:$0xff]
    %v291 = vld [vmem:[#allocation7 + $0x188] sm:$0xff]
    %v292 = vld [vmem:[#allocation7 + $0x190] sm:$0xff]
    %v293 = vld [vmem:[#allocation7 + $0x198] sm:$0xff]
    %v294 = vld [vmem:[#allocation7 + $0x1a0] sm:$0xff]
    %v295 = vld [vmem:[#allocation7 + $0x1a8] sm:$0xff]
    %v296 = vld [vmem:[#allocation7 + $0x1b0] sm:$0xff]
    %v297 = vld [vmem:[#allocation7 + $0x1b8] sm:$0xff]
    %v298 = vld [vmem:[#allocation7 + $0x1c0] sm:$0xff]
    %v299 = vld [vmem:[#allocation7 + $0x1c8] sm:$0xff]
    %v300 = vld [vmem:[#allocation7 + $0x1d0] sm:$0xff]
    %v301 = vld [vmem:[#allocation7 + $0x1d8] sm:$0xff]
    %v302 = vld [vmem:[#allocation7 + $0x1e0] sm:$0xff]
    %v303 = vld [vmem:[#allocation7 + $0x1e8] sm:$0xff]
    %v304 = vld [vmem:[#allocation7 + $0x1f0] sm:$0xff]
    %v305 = vld [vmem:[#allocation7 + $0x1f8] sm:$0xff]
    %v306 = vld [vmem:[%s4] sm:$0x3]
    %v308 = vlaneseq
    %v309 = vshrl.u32 %v308, 7
    %v310 = vsub.s32 0, %v309
    %v311 = vrot.slane %v306, %v310
    %v312 = vlaneseq
    %v313 = vshrl.u32 %v312, 7
    %v314 = vsub.s32 1, %v313
    %v315 = vrot.slane %v306, %v314
    %v382 = vunpack.c.l.b16 %v242
    %v383 = vunpack.c.h.b16 %v242
    %v384 = vunpack.c.l.b16 %v243
    %v385 = vunpack.c.h.b16 %v243
    %v386 = vunpack.c.l.b16 %v244
    %v387 = vunpack.c.h.b16 %v244
    %v388 = vunpack.c.l.b16 %v245
    %v389 = vunpack.c.h.b16 %v245
    %v390 = vunpack.c.l.b16 %v246
    %v391 = vunpack.c.h.b16 %v246
    %v392 = vunpack.c.l.b16 %v247
    %v393 = vunpack.c.h.b16 %v247
    %v394 = vunpack.c.l.b16 %v248
    %v395 = vunpack.c.h.b16 %v248
    %v396 = vunpack.c.l.b16 %v249
    %v397 = vunpack.c.h.b16 %v249
    %v398 = vunpack.c.l.b16 %v250
    %v399 = vunpack.c.h.b16 %v250
    %v400 = vunpack.c.l.b16 %v251
    %v401 = vunpack.c.h.b16 %v251
    %v402 = vunpack.c.l.b16 %v252
    %v403 = vunpack.c.h.b16 %v252
    %v404 = vunpack.c.l.b16 %v253
    %v405 = vunpack.c.h.b16 %v253
    %v406 = vunpack.c.l.b16 %v254
    %v407 = vunpack.c.h.b16 %v254
    %v408 = vunpack.c.l.b16 %v255
    %v409 = vunpack.c.h.b16 %v255
    %v410 = vunpack.c.l.b16 %v256
    %v411 = vunpack.c.h.b16 %v256
    %v412 = vunpack.c.l.b16 %v257
    %v413 = vunpack.c.h.b16 %v257
    %v414 = vunpack.c.l.b16 %v258
    %v415 = vunpack.c.h.b16 %v258
    %v416 = vunpack.c.l.b16 %v259
    %v417 = vunpack.c.h.b16 %v259
    %v418 = vunpack.c.l.b16 %v260
    %v419 = vunpack.c.h.b16 %v260
    %v420 = vunpack.c.l.b16 %v261
    %v421 = vunpack.c.h.b16 %v261
    %v422 = vunpack.c.l.b16 %v262
    %v423 = vunpack.c.h.b16 %v262
    %v424 = vunpack.c.l.b16 %v263
    %v425 = vunpack.c.h.b16 %v263
    %v426 = vunpack.c.l.b16 %v264
    %v427 = vunpack.c.h.b16 %v264
    %v428 = vunpack.c.l.b16 %v265
    %v429 = vunpack.c.h.b16 %v265
    %v430 = vunpack.c.l.b16 %v266
    %v431 = vunpack.c.h.b16 %v266
    %v432 = vunpack.c.l.b16 %v267
    %v433 = vunpack.c.h.b16 %v267
    %v434 = vunpack.c.l.b16 %v268
    %v435 = vunpack.c.h.b16 %v268
    %v436 = vunpack.c.l.b16 %v269
    %v437 = vunpack.c.h.b16 %v269
    %v438 = vunpack.c.l.b16 %v270
    %v439 = vunpack.c.h.b16 %v270
    %v440 = vunpack.c.l.b16 %v271
    %v441 = vunpack.c.h.b16 %v271
    %v442 = vunpack.c.l.b16 %v272
    %v443 = vunpack.c.h.b16 %v272
    %v444 = vunpack.c.l.b16 %v273
    %v445 = vunpack.c.h.b16 %v273
    %v446 = vunpack.c.l.b16 %v274
    %v447 = vunpack.c.h.b16 %v274
    %v448 = vunpack.c.l.b16 %v275
    %v449 = vunpack.c.h.b16 %v275
    %v450 = vunpack.c.l.b16 %v276
    %v451 = vunpack.c.h.b16 %v276
    %v452 = vunpack.c.l.b16 %v277
    %v453 = vunpack.c.h.b16 %v277
    %v454 = vunpack.c.l.b16 %v278
    %v455 = vunpack.c.h.b16 %v278
    %v456 = vunpack.c.l.b16 %v279
    %v457 = vunpack.c.h.b16 %v279
    %v458 = vunpack.c.l.b16 %v280
    %v459 = vunpack.c.h.b16 %v280
    %v460 = vunpack.c.l.b16 %v281
    %v461 = vunpack.c.h.b16 %v281
    %v462 = vunpack.c.l.b16 %v282
    %v463 = vunpack.c.h.b16 %v282
    %v464 = vunpack.c.l.b16 %v283
    %v465 = vunpack.c.h.b16 %v283
    %v466 = vunpack.c.l.b16 %v284
    %v467 = vunpack.c.h.b16 %v284
    %v468 = vunpack.c.l.b16 %v285
    %v469 = vunpack.c.h.b16 %v285
    %v470 = vunpack.c.l.b16 %v286
    %v471 = vunpack.c.h.b16 %v286
    %v472 = vunpack.c.l.b16 %v287
    %v473 = vunpack.c.h.b16 %v287
    %v474 = vunpack.c.l.b16 %v288
    %v475 = vunpack.c.h.b16 %v288
    %v476 = vunpack.c.l.b16 %v289
    %v477 = vunpack.c.h.b16 %v289
    %v478 = vunpack.c.l.b16 %v290
    %v479 = vunpack.c.h.b16 %v290
    %v480 = vunpack.c.l.b16 %v291
    %v481 = vunpack.c.h.b16 %v291
    %v482 = vunpack.c.l.b16 %v292
    %v483 = vunpack.c.h.b16 %v292
    %v484 = vunpack.c.l.b16 %v293
    %v485 = vunpack.c.h.b16 %v293
    %v486 = vunpack.c.l.b16 %v294
    %v487 = vunpack.c.h.b16 %v294
    %v488 = vunpack.c.l.b16 %v295
    %v489 = vunpack.c.h.b16 %v295
    %v490 = vunpack.c.l.b16 %v296
    %v491 = vunpack.c.h.b16 %v296
    %v492 = vunpack.c.l.b16 %v297
    %v493 = vunpack.c.h.b16 %v297
    %v494 = vunpack.c.l.b16 %v298
    %v495 = vunpack.c.h.b16 %v298
    %v496 = vunpack.c.l.b16 %v299
    %v497 = vunpack.c.h.b16 %v299
    %v498 = vunpack.c.l.b16 %v300
    %v499 = vunpack.c.h.b16 %v300
    %v500 = vunpack.c.l.b16 %v301
    %v501 = vunpack.c.h.b16 %v301
    %v502 = vunpack.c.l.b16 %v302
    %v503 = vunpack.c.h.b16 %v302
    %v504 = vunpack.c.l.b16 %v303
    %v505 = vunpack.c.h.b16 %v303
    %v506 = vunpack.c.l.b16 %v304
    %v507 = vunpack.c.h.b16 %v304
    %v508 = vunpack.c.l.b16 %v305
    %v509 = vunpack.c.h.b16 %v305
    %v510 = vpack.c.b16 %v384, %v382
    %v511 = vpack.c.b16 %v385, %v383
    %v512 = vpack.c.b16 %v388, %v386
    %v513 = vpack.c.b16 %v389, %v387
    %v514 = vpack.c.b16 %v392, %v390
    %v515 = vpack.c.b16 %v393, %v391
    %v516 = vpack.c.b16 %v396, %v394
    %v517 = vpack.c.b16 %v397, %v395
    %v518 = vpack.c.b16 %v400, %v398
    %v519 = vpack.c.b16 %v401, %v399
    %v520 = vpack.c.b16 %v404, %v402
    %v521 = vpack.c.b16 %v405, %v403
    %v522 = vpack.c.b16 %v408, %v406
    %v523 = vpack.c.b16 %v409, %v407
    %v524 = vpack.c.b16 %v412, %v410
    %v525 = vpack.c.b16 %v413, %v411
    %v526 = vpack.c.b16 %v416, %v414
    %v527 = vpack.c.b16 %v417, %v415
    %v528 = vpack.c.b16 %v420, %v418
    %v529 = vpack.c.b16 %v421, %v419
    %v530 = vpack.c.b16 %v424, %v422
    %v531 = vpack.c.b16 %v425, %v423
    %v532 = vpack.c.b16 %v428, %v426
    %v533 = vpack.c.b16 %v429, %v427
    %v534 = vpack.c.b16 %v432, %v430
    %v535 = vpack.c.b16 %v433, %v431
    %v536 = vpack.c.b16 %v436, %v434
    %v537 = vpack.c.b16 %v437, %v435
    %v538 = vpack.c.b16 %v440, %v438
    %v539 = vpack.c.b16 %v441, %v439
    %v540 = vpack.c.b16 %v444, %v442
    %v541 = vpack.c.b16 %v445, %v443
    %v542 = vpack.c.b16 %v448, %v446
    %v543 = vpack.c.b16 %v449, %v447
    %v544 = vpack.c.b16 %v452, %v450
    %v545 = vpack.c.b16 %v453, %v451
    %v546 = vpack.c.b16 %v456, %v454
    %v547 = vpack.c.b16 %v457, %v455
    %v548 = vpack.c.b16 %v460, %v458
    %v549 = vpack.c.b16 %v461, %v459
    %v550 = vpack.c.b16 %v464, %v462
    %v551 = vpack.c.b16 %v465, %v463
    %v552 = vpack.c.b16 %v468, %v466
    %v553 = vpack.c.b16 %v469, %v467
    %v554 = vpack.c.b16 %v472, %v470
    %v555 = vpack.c.b16 %v473, %v471
    %v556 = vpack.c.b16 %v476, %v474
    %v557 = vpack.c.b16 %v477, %v475
    %v558 = vpack.c.b16 %v480, %v478
    %v559 = vpack.c.b16 %v481, %v479
    %v560 = vpack.c.b16 %v484, %v482
    %v561 = vpack.c.b16 %v485, %v483
    %v562 = vpack.c.b16 %v488, %v486
    %v563 = vpack.c.b16 %v489, %v487
    %v564 = vpack.c.b16 %v492, %v490
    %v565 = vpack.c.b16 %v493, %v491
    %v566 = vpack.c.b16 %v496, %v494
    %v567 = vpack.c.b16 %v497, %v495
    %v568 = vpack.c.b16 %v500, %v498
    %v569 = vpack.c.b16 %v501, %v499
    %v570 = vpack.c.b16 %v504, %v502
    %v571 = vpack.c.b16 %v505, %v503
    %v572 = vpack.c.b16 %v508, %v506
    %v573 = vpack.c.b16 %v509, %v507
    %638 = vmatprep.subr.bf16.mxu0 %v511
    %639 = vmatpush1.bf16.msra.mxu0 %v510
    %640 = vmatprep.subr.bf16.mxu0 %v513
    %641 = vmatpush1.bf16.msra.mxu0 %v512
    %642 = vmatprep.subr.bf16.mxu0 %v515
    %643 = vmatpush1.bf16.msra.mxu0 %v514
    %644 = vmatprep.subr.bf16.mxu0 %v517
    %645 = vmatpush1.bf16.msra.mxu0 %v516
    %646 = vmatprep.subr.bf16.mxu0 %v519
    %647 = vmatpush1.bf16.msra.mxu0 %v518
    %648 = vmatprep.subr.bf16.mxu0 %v521
    %649 = vmatpush1.bf16.msra.mxu0 %v520
    %650 = vmatprep.subr.bf16.mxu0 %v523
    %651 = vmatpush1.bf16.msra.mxu0 %v522
    %652 = vmatprep.subr.bf16.mxu0 %v525
    %653 = vmatpush1.bf16.msra.mxu0 %v524
    %654 = vmatprep.subr.bf16.mxu0 %v527
    %655 = vmatpush1.bf16.msra.mxu0 %v526
    %656 = vmatprep.subr.bf16.mxu0 %v529
    %657 = vmatpush1.bf16.msra.mxu0 %v528
    %658 = vmatprep.subr.bf16.mxu0 %v531
    %659 = vmatpush1.bf16.msra.mxu0 %v530
    %660 = vmatprep.subr.bf16.mxu0 %v533
    %661 = vmatpush1.bf16.msra.mxu0 %v532
    %662 = vmatprep.subr.bf16.mxu0 %v535
    %663 = vmatpush1.bf16.msra.mxu0 %v534
    %664 = vmatprep.subr.bf16.mxu0 %v537
    %665 = vmatpush1.bf16.msra.mxu0 %v536
    %666 = vmatprep.subr.bf16.mxu0 %v539
    %667 = vmatpush1.bf16.msra.mxu0 %v538
    %668 = vmatprep.subr.bf16.mxu0 %v541
    %669 = vmatpush1.bf16.msra.mxu0 %v540
    %670 = vmatprep.mubr.bf16.mxu0 %v239
    %671 = vmatmul.mubr.bf16.gmra.mrb[0].mxu0 %v238
    %v672 = vpop.f32.mrb[0].mxu0
    %v673 = vadd.f32 %v311, %v672
    %v674 = vpop.f32.mrb[0].mxu0
    %v675 = vadd.f32 %v315, %v674
    %v676 = vpop.f32.mrb[0].mxu0
    %v677 = vpop.f32.mrb[0].mxu0
    %678 = vdwg.mxu0
    %679 = vmatprep.subr.bf16.mxu0 %v543
    %680 = vmatpush1.bf16.msra.mxu0 %v542
    %681 = vmatprep.subr.bf16.mxu0 %v545
    %682 = vmatpush1.bf16.msra.mxu0 %v544
    %683 = vmatprep.subr.bf16.mxu0 %v547
    %684 = vmatpush1.bf16.msra.mxu0 %v546
    %685 = vmatprep.subr.bf16.mxu0 %v549
    %686 = vmatpush1.bf16.msra.mxu0 %v548
    %687 = vmatprep.subr.bf16.mxu0 %v551
    %688 = vmatpush1.bf16.msra.mxu0 %v550
    %689 = vmatprep.subr.bf16.mxu0 %v553
    %690 = vmatpush1.bf16.msra.mxu0 %v552
    %691 = vmatprep.subr.bf16.mxu0 %v555
    %692 = vmatpush1.bf16.msra.mxu0 %v554
    %693 = vmatprep.subr.bf16.mxu0 %v557
    %694 = vmatpush1.bf16.msra.mxu0 %v556
    %695 = vmatprep.subr.bf16.mxu0 %v559
    %696 = vmatpush1.bf16.msra.mxu0 %v558
    %697 = vmatprep.subr.bf16.mxu0 %v561
    %698 = vmatpush1.bf16.msra.mxu0 %v560
    %699 = vmatprep.subr.bf16.mxu0 %v563
    %700 = vmatpush1.bf16.msra.mxu0 %v562
    %701 = vmatprep.subr.bf16.mxu0 %v565
    %702 = vmatpush1.bf16.msra.mxu0 %v564
    %703 = vmatprep.subr.bf16.mxu0 %v567
    %704 = vmatpush1.bf16.msra.mxu0 %v566
    %705 = vmatprep.subr.bf16.mxu0 %v569
    %706 = vmatpush1.bf16.msra.mxu0 %v568
    %707 = vmatprep.subr.bf16.mxu0 %v571
    %708 = vmatpush1.bf16.msra.mxu0 %v570
    %709 = vmatprep.subr.bf16.mxu0 %v573
    %710 = vmatpush1.bf16.msra.mxu0 %v572
    %711 = vmatprep.mubr.bf16.mxu0 %v241
    %712 = vmatmul.mubr.bf16.gmra.mrb[0].mxu0 %v240
    %v713 = vpop.f32.mrb[0].mxu0
    %v714 = vadd.f32 %v673, %v713
    %v715 = vpop.f32.mrb[0].mxu0
    %v716 = vadd.f32 %v675, %v715
    %v717 = vpop.f32.mrb[0].mxu0
    %v718 = vpop.f32.mrb[0].mxu0
    %719 = vdwg.mxu0
    %v720 = vpack.c.bf16 %v714, %v714
    %v721 = vpack.c.bf16 %v716, %v716
    %v722 = vmax.bf16 %v720, 0
    %v723 = vmax.bf16 %v721, 0
    %v724 = vld [vmem:[#allocation8] sm:$0xff]
    %v725 = vld [vmem:[#allocation8 + $0x8] sm:$0xff]
    %v726 = vld [vmem:[#allocation8 + $0x10] sm:$0xff]
    %v727 = vld [vmem:[#allocation8 + $0x18] sm:$0xff]
    %v728 = vld [vmem:[#allocation8 + $0x20] sm:$0xff]
    %v729 = vld [vmem:[#allocation8 + $0x28] sm:$0xff]
    %v730 = vld [vmem:[#allocation8 + $0x30] sm:$0xff]
    %v731 = vld [vmem:[#allocation8 + $0x38] sm:$0xff]
    %v732 = vld [vmem:[#allocation8 + $0x40] sm:$0xff]
    %v733 = vld [vmem:[#allocation8 + $0x48] sm:$0xff]
    %v734 = vld [vmem:[#allocation8 + $0x50] sm:$0xff]
    %v735 = vld [vmem:[#allocation8 + $0x58] sm:$0xff]
    %v736 = vld [vmem:[#allocation8 + $0x60] sm:$0xff]
    %v737 = vld [vmem:[#allocation8 + $0x68] sm:$0xff]
    %v738 = vld [vmem:[#allocation8 + $0x70] sm:$0xff]
    %v739 = vld [vmem:[#allocation8 + $0x78] sm:$0xff]
    %v740 = vld [vmem:[#allocation8 + $0x80] sm:$0xff]
    %v741 = vld [vmem:[#allocation8 + $0x88] sm:$0xff]
    %v742 = vld [vmem:[#allocation8 + $0x90] sm:$0xff]
    %v743 = vld [vmem:[#allocation8 + $0x98] sm:$0xff]
    %v744 = vld [vmem:[#allocation8 + $0xa0] sm:$0xff]
    %v745 = vld [vmem:[#allocation8 + $0xa8] sm:$0xff]
    %v746 = vld [vmem:[#allocation8 + $0xb0] sm:$0xff]
    %v747 = vld [vmem:[#allocation8 + $0xb8] sm:$0xff]
    %v748 = vld [vmem:[#allocation8 + $0xc0] sm:$0xff]
    %v749 = vld [vmem:[#allocation8 + $0xc8] sm:$0xff]
    %v750 = vld [vmem:[#allocation8 + $0xd0] sm:$0xff]
    %v751 = vld [vmem:[#allocation8 + $0xd8] sm:$0xff]
    %v752 = vld [vmem:[#allocation8 + $0xe0] sm:$0xff]
    %v753 = vld [vmem:[#allocation8 + $0xe8] sm:$0xff]
    %v754 = vld [vmem:[#allocation8 + $0xf0] sm:$0xff]
    %v755 = vld [vmem:[#allocation8 + $0xf8] sm:$0xff]
    %v756 = vld [vmem:[%s6] sm:$0x3]
    %v758 = vlaneseq
    %v759 = vshrl.u32 %v758, 7
    %v760 = vsub.s32 0, %v759
    %v761 = vrot.slane %v756, %v760
    %v762 = vlaneseq
    %v763 = vshrl.u32 %v762, 7
    %v764 = vsub.s32 1, %v763
    %v765 = vrot.slane %v756, %v764
    %v800 = vunpack.c.l.b16 %v724
    %v801 = vunpack.c.h.b16 %v724
    %v802 = vunpack.c.l.b16 %v725
    %v803 = vunpack.c.h.b16 %v725
    %v804 = vunpack.c.l.b16 %v726
    %v805 = vunpack.c.h.b16 %v726
    %v806 = vunpack.c.l.b16 %v727
    %v807 = vunpack.c.h.b16 %v727
    %v808 = vunpack.c.l.b16 %v728
    %v809 = vunpack.c.h.b16 %v728
    %v810 = vunpack.c.l.b16 %v729
    %v811 = vunpack.c.h.b16 %v729
    %v812 = vunpack.c.l.b16 %v730
    %v813 = vunpack.c.h.b16 %v730
    %v814 = vunpack.c.l.b16 %v731
    %v815 = vunpack.c.h.b16 %v731
    %v816 = vunpack.c.l.b16 %v732
    %v817 = vunpack.c.h.b16 %v732
    %v818 = vunpack.c.l.b16 %v733
    %v819 = vunpack.c.h.b16 %v733
    %v820 = vunpack.c.l.b16 %v734
    %v821 = vunpack.c.h.b16 %v734
    %v822 = vunpack.c.l.b16 %v735
    %v823 = vunpack.c.h.b16 %v735
    %v824 = vunpack.c.l.b16 %v736
    %v825 = vunpack.c.h.b16 %v736
    %v826 = vunpack.c.l.b16 %v737
    %v827 = vunpack.c.h.b16 %v737
    %v828 = vunpack.c.l.b16 %v738
    %v829 = vunpack.c.h.b16 %v738
    %v830 = vunpack.c.l.b16 %v739
    %v831 = vunpack.c.h.b16 %v739
    %v832 = vunpack.c.l.b16 %v740
    %v833 = vunpack.c.h.b16 %v740
    %v834 = vunpack.c.l.b16 %v741
    %v835 = vunpack.c.h.b16 %v741
    %v836 = vunpack.c.l.b16 %v742
    %v837 = vunpack.c.h.b16 %v742
    %v838 = vunpack.c.l.b16 %v743
    %v839 = vunpack.c.h.b16 %v743
    %v840 = vunpack.c.l.b16 %v744
    %v841 = vunpack.c.h.b16 %v744
    %v842 = vunpack.c.l.b16 %v745
    %v843 = vunpack.c.h.b16 %v745
    %v844 = vunpack.c.l.b16 %v746
    %v845 = vunpack.c.h.b16 %v746
    %v846 = vunpack.c.l.b16 %v747
    %v847 = vunpack.c.h.b16 %v747
    %v848 = vunpack.c.l.b16 %v748
    %v849 = vunpack.c.h.b16 %v748
    %v850 = vunpack.c.l.b16 %v749
    %v851 = vunpack.c.h.b16 %v749
    %v852 = vunpack.c.l.b16 %v750
    %v853 = vunpack.c.h.b16 %v750
    %v854 = vunpack.c.l.b16 %v751
    %v855 = vunpack.c.h.b16 %v751
    %v856 = vunpack.c.l.b16 %v752
    %v857 = vunpack.c.h.b16 %v752
    %v858 = vunpack.c.l.b16 %v753
    %v859 = vunpack.c.h.b16 %v753
    %v860 = vunpack.c.l.b16 %v754
    %v861 = vunpack.c.h.b16 %v754
    %v862 = vunpack.c.l.b16 %v755
    %v863 = vunpack.c.h.b16 %v755
    %v864 = vpack.c.b16 %v802, %v800
    %v865 = vpack.c.b16 %v803, %v801
    %v866 = vpack.c.b16 %v806, %v804
    %v867 = vpack.c.b16 %v807, %v805
    %v868 = vpack.c.b16 %v810, %v808
    %v869 = vpack.c.b16 %v811, %v809
    %v870 = vpack.c.b16 %v814, %v812
    %v871 = vpack.c.b16 %v815, %v813
    %v872 = vpack.c.b16 %v818, %v816
    %v873 = vpack.c.b16 %v819, %v817
    %v874 = vpack.c.b16 %v822, %v820
    %v875 = vpack.c.b16 %v823, %v821
    %v876 = vpack.c.b16 %v826, %v824
    %v877 = vpack.c.b16 %v827, %v825
    %v878 = vpack.c.b16 %v830, %v828
    %v879 = vpack.c.b16 %v831, %v829
    %v880 = vpack.c.b16 %v834, %v832
    %v881 = vpack.c.b16 %v835, %v833
    %v882 = vpack.c.b16 %v838, %v836
    %v883 = vpack.c.b16 %v839, %v837
    %v884 = vpack.c.b16 %v842, %v840
    %v885 = vpack.c.b16 %v843, %v841
    %v886 = vpack.c.b16 %v846, %v844
    %v887 = vpack.c.b16 %v847, %v845
    %v888 = vpack.c.b16 %v850, %v848
    %v889 = vpack.c.b16 %v851, %v849
    %v890 = vpack.c.b16 %v854, %v852
    %v891 = vpack.c.b16 %v855, %v853
    %v892 = vpack.c.b16 %v858, %v856
    %v893 = vpack.c.b16 %v859, %v857
    %v894 = vpack.c.b16 %v862, %v860
    %v895 = vpack.c.b16 %v863, %v861
    %928 = vmatprep.subr.bf16.mxu0 %v865
    %929 = vmatpush1.bf16.msra.mxu0 %v864
    %930 = vmatprep.subr.bf16.mxu0 %v867
    %931 = vmatpush1.bf16.msra.mxu0 %v866
    %932 = vmatprep.subr.bf16.mxu0 %v869
    %933 = vmatpush1.bf16.msra.mxu0 %v868
    %934 = vmatprep.subr.bf16.mxu0 %v871
    %935 = vmatpush1.bf16.msra.mxu0 %v870
    %936 = vmatprep.subr.bf16.mxu0 %v873
    %937 = vmatpush1.bf16.msra.mxu0 %v872
    %938 = vmatprep.subr.bf16.mxu0 %v875
    %939 = vmatpush1.bf16.msra.mxu0 %v874
    %940 = vmatprep.subr.bf16.mxu0 %v877
    %941 = vmatpush1.bf16.msra.mxu0 %v876
    %942 = vmatprep.subr.bf16.mxu0 %v879
    %943 = vmatpush1.bf16.msra.mxu0 %v878
    %944 = vmatprep.subr.bf16.mxu0 %v881
    %945 = vmatpush1.bf16.msra.mxu0 %v880
    %946 = vmatprep.subr.bf16.mxu0 %v883
    %947 = vmatpush1.bf16.msra.mxu0 %v882
    %948 = vmatprep.subr.bf16.mxu0 %v885
    %949 = vmatpush1.bf16.msra.mxu0 %v884
    %950 = vmatprep.subr.bf16.mxu0 %v887
    %951 = vmatpush1.bf16.msra.mxu0 %v886
    %952 = vmatprep.subr.bf16.mxu0 %v889
    %953 = vmatpush1.bf16.msra.mxu0 %v888
    %954 = vmatprep.subr.bf16.mxu0 %v891
    %955 = vmatpush1.bf16.msra.mxu0 %v890
    %956 = vmatprep.subr.bf16.mxu0 %v893
    %957 = vmatpush1.bf16.msra.mxu0 %v892
    %958 = vmatprep.subr.bf16.mxu0 %v895
    %959 = vmatpush1.bf16.msra.mxu0 %v894
    %960 = vmatprep.mubr.bf16.mxu0 %v723
    %961 = vmatmul.mubr.bf16.gmra.mrb[0].mxu0 %v722
    %v962 = vpop.f32.mrb[0].mxu0
    %v963 = vadd.f32 %v761, %v962
    %v964 = vpop.f32.mrb[0].mxu0
    %v965 = vadd.f32 %v765, %v964
    %v966 = vpop.f32.mrb[0].mxu0
    %v967 = vpop.f32.mrb[0].mxu0
    %968 = vdwg.mxu0
    %v969 = vpack.c.bf16 %v963, %v963
    %v970 = vpack.c.bf16 %v965, %v965
    %v971 = vmax.bf16 %v969, 0
    %v972 = vmax.bf16 %v970, 0
    %v973 = vld [vmem:[#allocation10] sm:$0xf]
    %v974 = vld [vmem:[#allocation10 + $0x4] sm:$0xf]
    %v975 = vld [vmem:[#allocation10 + $0x8] sm:$0xf]
    %v976 = vld [vmem:[#allocation10 + $0xc] sm:$0xf]
    %v977 = vld [vmem:[#allocation10 + $0x10] sm:$0xf]
    %v978 = vld [vmem:[#allocation10 + $0x14] sm:$0xf]
    %v979 = vld [vmem:[#allocation10 + $0x18] sm:$0xf]
    %v980 = vld [vmem:[#allocation10 + $0x1c] sm:$0xf]
    %v981 = vld [vmem:[#allocation10 + $0x20] sm:$0xf]
    %v982 = vld [vmem:[#allocation10 + $0x24] sm:$0xf]
    %v983 = vld [vmem:[#allocation10 + $0x28] sm:$0xf]
    %v984 = vld [vmem:[#allocation10 + $0x2c] sm:$0xf]
    %v985 = vld [vmem:[#allocation10 + $0x30] sm:$0xf]
    %v986 = vld [vmem:[#allocation10 + $0x34] sm:$0xf]
    %v987 = vld [vmem:[#allocation10 + $0x38] sm:$0xf]
    %v988 = vld [vmem:[#allocation10 + $0x3c] sm:$0xf]
    %v989 = vld [vmem:[#allocation10 + $0x40] sm:$0xf]
    %v990 = vld [vmem:[#allocation10 + $0x44] sm:$0xf]
    %v991 = vld [vmem:[#allocation10 + $0x48] sm:$0xf]
    %v992 = vld [vmem:[#allocation10 + $0x4c] sm:$0xf]
    %v993 = vld [vmem:[#allocation10 + $0x50] sm:$0xf]
    %v994 = vld [vmem:[#allocation10 + $0x54] sm:$0xf]
    %v995 = vld [vmem:[#allocation10 + $0x58] sm:$0xf]
    %v996 = vld [vmem:[#allocation10 + $0x5c] sm:$0xf]
    %v997 = vld [vmem:[#allocation10 + $0x60] sm:$0xf]
    %v998 = vld [vmem:[#allocation10 + $0x64] sm:$0xf]
    %v999 = vld [vmem:[#allocation10 + $0x68] sm:$0xf]
    %v1000 = vld [vmem:[#allocation10 + $0x6c] sm:$0xf]
    %v1001 = vld [vmem:[#allocation10 + $0x70] sm:$0xf]
    %v1002 = vld [vmem:[#allocation10 + $0x74] sm:$0xf]
    %v1003 = vld [vmem:[#allocation10 + $0x78] sm:$0xf]
    %v1004 = vld [vmem:[#allocation10 + $0x7c] sm:$0xf]
    %v1005 = vld [vmem:[%s8] sm:$0x1]
    %v1007 = vlaneseq
    %v1008 = vshrl.u32 %v1007, 7
    %v1009 = vsub.s32 0, %v1008
    %v1010 = vrot.slane %v1005, %v1009
    %v1044 = vunpack.c.l.b16 %v973
    %v1045 = vunpack.c.l.b16 %v974
    %v1046 = vunpack.c.l.b16 %v975
    %v1047 = vunpack.c.l.b16 %v976
    %v1048 = vunpack.c.l.b16 %v977
    %v1049 = vunpack.c.l.b16 %v978
    %v1050 = vunpack.c.l.b16 %v979
    %v1051 = vunpack.c.l.b16 %v980
    %v1052 = vunpack.c.l.b16 %v981
    %v1053 = vunpack.c.l.b16 %v982
    %v1054 = vunpack.c.l.b16 %v983
    %v1055 = vunpack.c.l.b16 %v984
    %v1056 = vunpack.c.l.b16 %v985
    %v1057 = vunpack.c.l.b16 %v986
    %v1058 = vunpack.c.l.b16 %v987
    %v1059 = vunpack.c.l.b16 %v988
    %v1060 = vunpack.c.l.b16 %v989
    %v1061 = vunpack.c.l.b16 %v990
    %v1062 = vunpack.c.l.b16 %v991
    %v1063 = vunpack.c.l.b16 %v992
    %v1064 = vunpack.c.l.b16 %v993
    %v1065 = vunpack.c.l.b16 %v994
    %v1066 = vunpack.c.l.b16 %v995
    %v1067 = vunpack.c.l.b16 %v996
    %v1068 = vunpack.c.l.b16 %v997
    %v1069 = vunpack.c.l.b16 %v998
    %v1070 = vunpack.c.l.b16 %v999
    %v1071 = vunpack.c.l.b16 %v1000
    %v1072 = vunpack.c.l.b16 %v1001
    %v1073 = vunpack.c.l.b16 %v1002
    %v1074 = vunpack.c.l.b16 %v1003
    %v1075 = vunpack.c.l.b16 %v1004
    %v1076 = vpack.c.b16 %v1045, %v1044
    %v1077 = vpack.c.b16 %v1047, %v1046
    %v1078 = vpack.c.b16 %v1049, %v1048
    %v1079 = vpack.c.b16 %v1051, %v1050
    %v1080 = vpack.c.b16 %v1053, %v1052
    %v1081 = vpack.c.b16 %v1055, %v1054
    %v1082 = vpack.c.b16 %v1057, %v1056
    %v1083 = vpack.c.b16 %v1059, %v1058
    %v1084 = vpack.c.b16 %v1061, %v1060
    %v1085 = vpack.c.b16 %v1063, %v1062
    %v1086 = vpack.c.b16 %v1065, %v1064
    %v1087 = vpack.c.b16 %v1067, %v1066
    %v1088 = vpack.c.b16 %v1069, %v1068
    %v1089 = vpack.c.b16 %v1071, %v1070
    %v1090 = vpack.c.b16 %v1073, %v1072
    %v1091 = vpack.c.b16 %v1075, %v1074
    %1108 = vmatprep.subr.bf16.mxu0 0
    %1109 = vmatpush1.bf16.msra.mxu0 %v1076
    %1110 = vmatprep.subr.bf16.mxu0 0
    %1111 = vmatpush1.bf16.msra.mxu0 %v1077
    %1112 = vmatprep.subr.bf16.mxu0 0
    %1113 = vmatpush1.bf16.msra.mxu0 %v1078
    %1114 = vmatprep.subr.bf16.mxu0 0
    %1115 = vmatpush1.bf16.msra.mxu0 %v1079
    %1116 = vmatprep.subr.bf16.mxu0 0
    %1117 = vmatpush1.bf16.msra.mxu0 %v1080
    %1118 = vmatprep.subr.bf16.mxu0 0
    %1119 = vmatpush1.bf16.msra.mxu0 %v1081
    %1120 = vmatprep.subr.bf16.mxu0 0
    %1121 = vmatpush1.bf16.msra.mxu0 %v1082
    %1122 = vmatprep.subr.bf16.mxu0 0
    %1123 = vmatpush1.bf16.msra.mxu0 %v1083
    %1124 = vmatprep.subr.bf16.mxu0 0
    %1125 = vmatpush1.bf16.msra.mxu0 %v1084
    %1126 = vmatprep.subr.bf16.mxu0 0
    %1127 = vmatpush1.bf16.msra.mxu0 %v1085
    %1128 = vmatprep.subr.bf16.mxu0 0
    %1129 = vmatpush1.bf16.msra.mxu0 %v1086
    %1130 = vmatprep.subr.bf16.mxu0 0
    %1131 = vmatpush1.bf16.msra.mxu0 %v1087
    %1132 = vmatprep.subr.bf16.mxu0 0
    %1133 = vmatpush1.bf16.msra.mxu0 %v1088
    %1134 = vmatprep.subr.bf16.mxu0 0
    %1135 = vmatpush1.bf16.msra.mxu0 %v1089
    %1136 = vmatprep.subr.bf16.mxu0 0
    %1137 = vmatpush1.bf16.msra.mxu0 %v1090
    %1138 = vmatprep.subr.bf16.mxu0 0
    %1139 = vmatpush1.bf16.msra.mxu0 %v1091
    %1140 = vmatprep.mubr.bf16.mxu0 %v972
    %1141 = vmatmul.mubr.bf16.gmra.mrb[0].mxu0 %v971
    %v1142 = vpop.f32.mrb[0].mxu0
    %v1143 = vadd.f32 %v1010, %v1142
    %v1144 = vpop.f32.mrb[0].mxu0
    %v1145 = vpop.f32.mrb[0].mxu0
    %v1146 = vpop.f32.mrb[0].mxu0
    %1147 = vdwg.mxu0
    %v1148 = vpack.c.bf16 %v1143, %v1143
    %1149 = vst [vmem:[#allocation11] sm:$0xf] %v1148
    // Predicated region
    $region58: #{tpu_custom_call.1} parent=1 // pred_check
      _
    $region59: #{tpu_custom_call.1} parent=1 // pred_check_branch
      %1151 = sbr.rel (0) target = $region61
    $region60: #{tpu_custom_call.1} parent=1 // pred_region
      %s1153 = ssub.s32 64, 64
      %1154 = vsyncadd [#allocation4], %s1153
      %s1156 = sshll.u32 [#allocation11], 4
      %s1157 = int_to_ptr.vmem [resolvable:$true] %s1156
      %1159 = dma.vmem_to_hbm [thread:$0]  %s1157, 64, %s9, [#allocation4]
    $region61: #{tpu_custom_call.1} parent=1 // pred_fallthru
      _
    // Predicated region
    $region62: #{tpu_custom_call.1} parent=1 // pred_check
      _
    $region63: #{tpu_custom_call.1} parent=1 // pred_check_branch
      %1161 = sbr.rel (0) target = $region65
    $region64: #{tpu_custom_call.1} parent=1 // pred_region
      %1162 = dma.done [#allocation4], 64
    $region65: #{tpu_custom_call.1} parent=1 // pred_fallthru
      _
    %1163 = vsyncpa [#allocation3], 1
    %1164 = vsyncpa [#allocation6], 1
    %1165 = vsyncpa [#allocation9], 1
    %1166 = vsyncpa [#allocation4], 1

</llo_original>
